<compile_context>
chip_gen: v7x
topology: tpu7x:2x2x1
jax: 0.10.0
libtpu: 0.0.40
codegen_flags: <defaults>
</compile_context>

<pallas_src>
import functools

import jax
import jax.numpy as jnp
from jax.experimental import pallas as pl
from jax.experimental.pallas import tpu as pltpu


# --------------------------------------------------------------------------- #
# helpers
# --------------------------------------------------------------------------- #
def _round_up(n: int, m: int) -> int:
    return (n + m - 1) // m * m


def _round_down8(n: int) -> int:
    return max(8, (n // 8) * 8)


def _vmem_capacity_bytes() -> int:
    """Per-TensorCore VMEM capacity; conservative (v7x) if undetectable."""
    try:
        info = pltpu.get_tpu_info()
        cap = getattr(info, "vmem_capacity_bytes", None)
        if cap:
            return int(cap)
    except Exception:
        pass
    return 64 << 20


def _vmem_policy():
    """Generation-aware VMEM budget / compiler limit / max batch tile."""
    cap = _vmem_capacity_bytes()
    if cap >= (96 << 20):       # v5e / v6e: 128 MiB per TC -> use it
        return dict(budget=88 << 20, limit=100 << 20, tb_max=1024)
    # v7x: 64 MiB per TC -> stay well under, leave compiler scratch headroom
    return dict(budget=36 << 20, limit=56 << 20, tb_max=512)


def _pick_batch_tile(B8: int, tb_max: int, min_steps: int = 8) -> int:
    """Largest batch tile <= tb_max that keeps enough grid steps for
    pipelining + v7x megacore sharding, without dropping below 256 rows."""
    TB = min(_round_down8(tb_max), B8)
    if B8 >= 512:
        TB = min(TB, max(256, _round_down8(B8 // min_steps)))
    elif B8 >= 16:
        TB = min(TB, _round_down8(B8 // 2))     # at least 2 steps
    return max(8, TB)


# --------------------------------------------------------------------------- #
# kernels
# --------------------------------------------------------------------------- #
def _gf_resident_kernel(x_ref, y_ref, wx_ref, bx_ref, wy_ref, by_ref,
                        wo_ref, bo_ref, *out_refs,
                        x_gate: bool, write_intermediates: bool):
    """All three weight matrices resident in VMEM; grid over batch only."""
    cdt = wx_ref.dtype  # compute dtype follows the (possibly bf16) weights
    out_x = jnp.dot(x_ref[...].astype(cdt), wx_ref[...],
                    preferred_element_type=jnp.float32) + bx_ref[...].astype(jnp.float32)
    out_y = jnp.dot(y_ref[...].astype(cdt), wy_ref[...],
                    preferred_element_type=jnp.float32) + by_ref[...].astype(jnp.float32)

    # sigmoid(z) == 0.5 * (tanh(z/2) + 1): single EUP op + cheap VPU fixup.
    if x_gate:
        fused = (0.5 * (jnp.tanh(0.5 * out_x) + 1.0)) * out_y
    else:
        fused = out_x * (0.5 * (jnp.tanh(0.5 * out_y) + 1.0))

    out = jnp.dot(fused.astype(wo_ref.dtype), wo_ref[...],
                  preferred_element_type=jnp.float32) + bo_ref[...].astype(jnp.float32)

    if write_intermediates:
        out_x_ref, out_y_ref, out_ref = out_refs
        out_x_ref[...] = out_x.astype(out_x_ref.dtype)
        out_y_ref[...] = out_y.astype(out_y_ref.dtype)
    else:
        (out_ref,) = out_refs
    out_ref[...] = out.astype(out_ref.dtype)


def _gf_dtiled_kernel(x_ref, y_ref, wx_ref, bx_ref, wy_ref, by_ref,
                      wo_ref, bo_ref, *refs,
                      x_gate: bool, write_intermediates: bool):
    """Fallback for large weights: grid = (batch_tiles, d_tiles).
    Per step: the D-slice of fc_x/fc_y + gate + partial fc_out accumulated
    into an f32 scratch; output written on the last d step."""
    if write_intermediates:
        out_x_ref, out_y_ref, out_ref, acc_ref = refs
    else:
        out_ref, acc_ref = refs

    j = pl.program_id(1)

    @pl.when(j == 0)
    def _():
        acc_ref[...] = jnp.zeros_like(acc_ref)

    cdt = wx_ref.dtype
    out_x = jnp.dot(x_ref[...].astype(cdt), wx_ref[...],
                    preferred_element_type=jnp.float32) + bx_ref[...].astype(jnp.float32)
    out_y = jnp.dot(y_ref[...].astype(cdt), wy_ref[...],
                    preferred_element_type=jnp.float32) + by_ref[...].astype(jnp.float32)

    if x_gate:
        fused = (0.5 * (jnp.tanh(0.5 * out_x) + 1.0)) * out_y
    else:
        fused = out_x * (0.5 * (jnp.tanh(0.5 * out_y) + 1.0))

    acc_ref[...] += jnp.dot(fused.astype(wo_ref.dtype), wo_ref[...],
                            preferred_element_type=jnp.float32)

    if write_intermediates:
        out_x_ref[...] = out_x.astype(out_x_ref.dtype)
        out_y_ref[...] = out_y.astype(out_y_ref.dtype)

    @pl.when(j == pl.num_programs(1) - 1)
    def _():
        out_ref[...] = (acc_ref[...] + bo_ref[...].astype(jnp.float32)
                        ).astype(out_ref.dtype)


# --------------------------------------------------------------------------- #
# params
# --------------------------------------------------------------------------- #
def prepare_params(params, *, compute_dtype=None):
    """Pad weights/biases to lane-dense (128-multiple) shapes ONCE, outside the
    per-call hot path. Optionally cast weights to `compute_dtype`
    (e.g. jnp.bfloat16) for full-rate MXU and halved weight DMA.
    Idempotent: already-prepared dicts pass through unchanged."""
    if isinstance(params, dict) and params.get("_prepared", False):
        return params

    input_dim, dim = params["w_x"].shape
    output_dim = params["w_out"].shape[1]
    IN = _round_up(input_dim, 128)
    D = _round_up(dim, 128)
    OUT = _round_up(output_dim, 128)

    def pad2(a, rows, cols, dt=None):
        a = jnp.asarray(a)
        if a.ndim == 1:
            a = a.reshape(1, -1)
        a = jnp.pad(a, ((0, rows - a.shape[0]), (0, cols - a.shape[1])))
        return a if dt is None else a.astype(dt)

    return dict(
        _prepared=True,
        dims=(int(input_dim), int(dim), int(output_dim)),
        w_x=pad2(params["w_x"], IN, D, compute_dtype),
        b_x=pad2(params["b_x"], 1, D),
        w_y=pad2(params["w_y"], IN, D, compute_dtype),
        b_y=pad2(params["b_y"], 1, D),
        w_out=pad2(params["w_out"], D, OUT, compute_dtype),
        b_out=pad2(params["b_out"], 1, OUT),
    )


# --------------------------------------------------------------------------- #
# forward
# --------------------------------------------------------------------------- #
def gated_fusion(x, y, params, *, x_gate=True, return_intermediates=True,
                 compute_dtype=None, batch_tile=None, feature_tile=None,
                 input_buffers=2):
    """GatedFusion forward. Returns (out_x, out_y, output) like the PyTorch
    module, or just `output` when return_intermediates=False.

    params: raw dict (w_x, b_x, w_y, b_y, w_out, b_out with weights stored
    [in_features, out_features]) or a prepare_params() dict (preferred in a
    training/serving loop — padding happens once).
    """
    assert x.shape == y.shape and x.ndim == 2
    p = prepare_params(params, compute_dtype=compute_dtype)
    input_dim, dim, output_dim = p["dims"]
    assert x.shape[1] == input_dim

    B = x.shape[0]
    dt = x.dtype
    act_bytes = jnp.dtype(dt).itemsize
    IN, D = p["w_x"].shape
    OUT = p["w_out"].shape[1]
    w_itemsize = jnp.dtype(p["w_x"].dtype).itemsize
    b_itemsize = jnp.dtype(p["b_x"].dtype).itemsize
    w_bytes = (2 * IN * D + D * OUT) * w_itemsize + (2 * D + OUT) * b_itemsize

    # ---- generation-aware VMEM policy + batch tile -------------------------
    policy = _vmem_policy()
    budget, vmem_limit = policy["budget"], policy["limit"]
    tb_max = batch_tile if batch_tile is not None else policy["tb_max"]

    B8 = _round_up(B, 8)
    TB = _pick_batch_tile(B8, tb_max, min_steps=8)

    def resident_need(t):
        # Weights: Pallas double-buffers even constant-index blocks -> 2x.
        weights = 2 * w_bytes
        per_out_row = (2 * D + OUT) if return_intermediates else OUT
        io = 2 * t * (2 * IN + per_out_row) * act_bytes      # double-buffered x/y + outputs
        temps = t * (4 * D + OUT) * 4                        # in-kernel f32 intermediates
        return weights + io + temps

    use_tiled = feature_tile is not None
    if not use_tiled:
        while TB > 8 and resident_need(TB) > budget:
            TB = _round_down8(TB // 2)
        if resident_need(TB) > budget:
            use_tiled = True  # weights alone don't fit -> feature-dim tiling fallback

    B_pad = _round_up(B8, TB)
    xp = jnp.pad(x, ((0, B_pad - B), (0, IN - input_dim)))
    yp = jnp.pad(y, ((0, B_pad - B), (0, IN - input_dim)))

    def x_tile_spec(index_map):
        if input_buffers != 2:
            # Deeper activation pipelining (only if a profile shows exposed DMA).
            return pl.BlockSpec((TB, IN), index_map,
                                pipeline_mode=pl.Buffered(input_buffers))
        return pl.BlockSpec((TB, IN), index_map)

    # ------------------------------------------------------------------ #
    # path 1: weights resident, grid over batch only
    # ------------------------------------------------------------------ #
    if not use_tiled:
        grid = (B_pad // TB,)
        tile = lambda f: pl.BlockSpec((TB, f), lambda i: (i, 0))
        full = lambda s: pl.BlockSpec(s, lambda i: (0, 0))

        in_specs = [x_tile_spec(lambda i: (i, 0)), x_tile_spec(lambda i: (i, 0)),
                    full((IN, D)), full((1, D)),
                    full((IN, D)), full((1, D)),
                    full((D, OUT)), full((1, OUT))]

        if return_intermediates:
            out_specs = [tile(D), tile(D), tile(OUT)]
            out_shape = [jax.ShapeDtypeStruct((B_pad, D), dt),
                         jax.ShapeDtypeStruct((B_pad, D), dt),
                         jax.ShapeDtypeStruct((B_pad, OUT), dt)]
            out_bytes = (2 * B_pad * D + B_pad * OUT) * act_bytes
        else:
            out_specs = [tile(OUT)]
            out_shape = [jax.ShapeDtypeStruct((B_pad, OUT), dt)]
            out_bytes = B_pad * OUT * act_bytes

        cost = pl.CostEstimate(
            flops=2 * B_pad * (2 * IN * D + D * OUT),
            transcendentals=B_pad * D,
            bytes_accessed=2 * B_pad * IN * act_bytes + w_bytes + out_bytes,
        )
        kernel = functools.partial(_gf_resident_kernel, x_gate=x_gate,
                                   write_intermediates=return_intermediates)
        results = pl.pallas_call(
            kernel,
            grid=grid,
            in_specs=in_specs,
            out_specs=out_specs,
            out_shape=out_shape,
            compiler_params=pltpu.CompilerParams(
                dimension_semantics=("parallel",),   # v7x: shard batch over 2 TCs
                vmem_limit_bytes=vmem_limit,
            ),
            cost_estimate=cost,
        )(xp, yp, p["w_x"], p["b_x"], p["w_y"], p["b_y"], p["w_out"], p["b_out"])

    # ------------------------------------------------------------------ #
    # path 2: feature(D)-tiled fallback, grid = (batch, D), f32 accumulator
    # ------------------------------------------------------------------ #
    else:
        nd128 = D // 128
        desired = _round_up(feature_tile, 128) if feature_tile is not None else 512

        def tiled_need(t, td):
            wstep = (2 * IN * td + td * OUT) * w_itemsize + (2 * td + OUT) * b_itemsize
            per_out_row = (2 * td * act_bytes) if return_intermediates else 0
            io = 2 * (t * 2 * IN * act_bytes + wstep + t * per_out_row) \
                + 2 * t * OUT * act_bytes
            temps = t * (4 * td + OUT) * 4 + t * OUT * 4     # f32 temporaries + acc scratch
            return io + temps

        # TD must divide D (= 128 * nd128) so blocks tile the padded weights exactly.
        cands = sorted({128 * k for k in range(1, nd128 + 1) if nd128 % k == 0},
                       reverse=True)
        TD = 128
        for c in cands:
            if c <= desired and tiled_need(TB, c) <= budget:
                TD = c
                break
        while TB > 8 and tiled_need(TB, TD) > budget:
            TB = _round_down8(TB // 2)
        B_pad = _round_up(B8, TB)
        xp = jnp.pad(x, ((0, B_pad - B), (0, IN - input_dim)))
        yp = jnp.pad(y, ((0, B_pad - B), (0, IN - input_dim)))

        grid = (B_pad // TB, D // TD)
        in_specs = [x_tile_spec(lambda i, j: (i, 0)),       # x/y refetched only when i changes
                    x_tile_spec(lambda i, j: (i, 0)),
                    pl.BlockSpec((IN, TD), lambda i, j: (0, j)),
                    pl.BlockSpec((1, TD), lambda i, j: (0, j)),
                    pl.BlockSpec((IN, TD), lambda i, j: (0, j)),
                    pl.BlockSpec((1, TD), lambda i, j: (0, j)),
                    pl.BlockSpec((TD, OUT), lambda i, j: (j, 0)),
                    pl.BlockSpec((1, OUT), lambda i, j: (0, 0))]
        out_spec_out = pl.BlockSpec((TB, OUT), lambda i, j: (i, 0))  # resident across j

        if return_intermediates:
            out_specs = [pl.BlockSpec((TB, TD), lambda i, j: (i, j)),
                         pl.BlockSpec((TB, TD), lambda i, j: (i, j)),
                         out_spec_out]
            out_shape = [jax.ShapeDtypeStruct((B_pad, D), dt),
                         jax.ShapeDtypeStruct((B_pad, D), dt),
                         jax.ShapeDtypeStruct((B_pad, OUT), dt)]
            out_bytes = (2 * B_pad * D + B_pad * OUT) * act_bytes
        else:
            out_specs = [out_spec_out]
            out_shape = [jax.ShapeDtypeStruct((B_pad, OUT), dt)]
            out_bytes = B_pad * OUT * act_bytes

        cost = pl.CostEstimate(
            flops=2 * B_pad * (2 * IN * D + D * OUT),
            transcendentals=B_pad * D,
            bytes_accessed=2 * B_pad * IN * act_bytes
                           + (B_pad // TB) * w_bytes + out_bytes,
        )
        kernel = functools.partial(_gf_dtiled_kernel, x_gate=x_gate,
                                   write_intermediates=return_intermediates)
        results = pl.pallas_call(
            kernel,
            grid=grid,
            in_specs=in_specs,
            out_specs=out_specs,
            out_shape=out_shape,
            scratch_shapes=[pltpu.VMEM((TB, OUT), jnp.float32)],
            compiler_params=pltpu.CompilerParams(
                dimension_semantics=("parallel", "arbitrary"),
                vmem_limit_bytes=vmem_limit,
            ),
            cost_estimate=cost,
        )(xp, yp, p["w_x"], p["b_x"], p["w_y"], p["b_y"], p["w_out"], p["b_out"])

    # ---- slice padded rows/columns off ------------------------------------
    if return_intermediates:
        out_x_p, out_y_p, out_p = results
        return (out_x_p[:B, :dim], out_y_p[:B, :dim], out_p[:B, :output_dim])
    (out_p,) = results
    return out_p[:B, :output_dim]


# --------------------------------------------------------------------------- #
# init + pure-JAX reference
# --------------------------------------------------------------------------- #
def init_params(key, input_dim, dim, output_dim, dtype=jnp.float32):
    """nn.Linear-style uniform(-1/sqrt(in), 1/sqrt(in)) init.
    Weights stored transposed: [in_features, out_features]."""
    ks = jax.random.split(key, 6)

    def lin(kw, kb, fan_in, fan_out):
        bound = 1.0 / jnp.sqrt(fan_in)
        w = jax.random.uniform(kw, (fan_in, fan_out), dtype, -bound, bound)
        b = jax.random.uniform(kb, (1, fan_out), dtype, -bound, bound)
        return w, b

    w_x, b_x = lin(ks[0], ks[1], input_dim, dim)
    w_y, b_y = lin(ks[2], ks[3], input_dim, dim)
    w_out, b_out = lin(ks[4], ks[5], dim, output_dim)
    return dict(w_x=w_x, b_x=b_x, w_y=w_y, b_y=b_y, w_out=w_out, b_out=b_out)


def gated_fusion_ref(x, y, params, *, x_gate=True):
    out_x = x @ params["w_x"] + params["b_x"]
    out_y = y @ params["w_y"] + params["b_y"]
    if x_gate:
        fused = jax.nn.sigmoid(out_x) * out_y
    else:
        fused = out_x * jax.nn.sigmoid(out_y)
    out = fused @ params["w_out"] + params["b_out"]
    return out_x, out_y, out


# --------------------------------------------------------------------------- #
# smoke test
# --------------------------------------------------------------------------- #
if __name__ == "__main__":
    key = jax.random.PRNGKey(0)
    kx, ky, kp, kx2, ky2, kp2 = jax.random.split(key, 6)

    # ---- resident-weights path, non-128-aligned dims, raw params -----------
    B, input_dim, dim, output_dim = 16, 64, 48, 24
    x = jax.random.normal(kx, (B, input_dim), jnp.float32)
    y = jax.random.normal(ky, (B, input_dim), jnp.float32)
    params = init_params(kp, input_dim, dim, output_dim)

    out_x, out_y, out = gated_fusion(x, y, params, x_gate=True)
    jax.block_until_ready((out_x, out_y, out))
    rx, ry, ro = gated_fusion_ref(x, y, params, x_gate=True)
    assert out_x.shape == rx.shape and out_y.shape == ry.shape and out.shape == ro.shape
    assert jnp.allclose(out_x, rx, atol=1e-4), "out_x mismatch"
    assert jnp.allclose(out_y, ry, atol=1e-4), "out_y mismatch"
    assert jnp.allclose(out, ro, atol=1e-4), "output mismatch"

    # ---- pre-padded (cached) params + output-only fast path ----------------
    prepped = prepare_params(params)
    out_only = gated_fusion(x, y, prepped, x_gate=True, return_intermediates=False)
    jax.block_until_ready(out_only)
    assert jnp.allclose(out_only, ro, atol=1e-4), "output-only mismatch"

    # ---- x_gate=False branch ------------------------------------------------
    _, _, out_f = gated_fusion(x, y, prepped, x_gate=False)
    _, _, ro_f = gated_fusion_ref(x, y, params, x_gate=False)
    assert jnp.allclose(out_f, ro_f, atol=1e-4), "x_gate=False mismatch"

    # ---- feature(D)-tiled fallback path (forced via feature_tile) -----------
    B2, in2, d2, od2 = 32, 200, 300, 40
    x2 = jax.random.normal(kx2, (B2, in2), jnp.float32)
    y2 = jax.random.normal(ky2, (B2, in2), jnp.float32)
    params2 = init_params(kp2, in2, d2, od2)
    tx, ty, to = gated_fusion(x2, y2, params2, x_gate=True, feature_tile=128)
    jax.block_until_ready((tx, ty, to))
    r2x, r2y, r2o = gated_fusion_ref(x2, y2, params2, x_gate=True)
    assert jnp.allclose(tx, r2x, atol=1e-3), "tiled out_x mismatch"
    assert jnp.allclose(ty, r2y, atol=1e-3), "tiled out_y mismatch"
    assert jnp.allclose(to, r2o, atol=1e-3), "tiled output mismatch"

    print("KERNEL_OK")
</pallas_src>

<mosaic_0001>
module attributes {stable_mosaic.version = 11 : i64} {
  func.func @_gf_resident_kernel(%arg0: i32, %arg1: memref<8x128xf32, #tpu.memory_space<vmem>>, %arg2: memref<8x128xf32, #tpu.memory_space<vmem>>, %arg3: memref<128x128xf32, #tpu.memory_space<vmem>>, %arg4: memref<1x128xf32, #tpu.memory_space<vmem>>, %arg5: memref<128x128xf32, #tpu.memory_space<vmem>>, %arg6: memref<1x128xf32, #tpu.memory_space<vmem>>, %arg7: memref<128x128xf32, #tpu.memory_space<vmem>>, %arg8: memref<1x128xf32, #tpu.memory_space<vmem>>, %arg9: memref<8x128xf32, #tpu.memory_space<vmem>>, %arg10: memref<8x128xf32, #tpu.memory_space<vmem>>, %arg11: memref<8x128xf32, #tpu.memory_space<vmem>>) attributes {dimension_semantics = [#tpu.dimension_semantics<parallel>], iteration_bounds = array<i64: 2>, scalar_prefetch = 0 : i64, scratch_operands = 0 : i64, tpu.core_type = #tpu.core_type<tc>, window_params = [{transform_indices = @transform_0, window_bounds = array<i64: 8, 128>}, {transform_indices = @transform_1, window_bounds = array<i64: 8, 128>}, {pipeline_mode = #tpu.pipeline_mode<synchronous>, transform_indices = @transform_2, window_bounds = array<i64: 128, 128>}, {pipeline_mode = #tpu.pipeline_mode<synchronous>, transform_indices = @transform_3, window_bounds = array<i64: 1, 128>}, {pipeline_mode = #tpu.pipeline_mode<synchronous>, transform_indices = @transform_4, window_bounds = array<i64: 128, 128>}, {pipeline_mode = #tpu.pipeline_mode<synchronous>, transform_indices = @transform_5, window_bounds = array<i64: 1, 128>}, {pipeline_mode = #tpu.pipeline_mode<synchronous>, transform_indices = @transform_6, window_bounds = array<i64: 128, 128>}, {pipeline_mode = #tpu.pipeline_mode<synchronous>, transform_indices = @transform_7, window_bounds = array<i64: 1, 128>}, {transform_indices = @transform_8, window_bounds = array<i64: 8, 128>}, {transform_indices = @transform_9, window_bounds = array<i64: 8, 128>}, {transform_indices = @transform_10, window_bounds = array<i64: 8, 128>}]} {
    %c0 = arith.constant 0 : index
    %c0_0 = arith.constant 0 : index
    %0 = vector.load %arg1[%c0, %c0_0] : memref<8x128xf32, #tpu.memory_space<vmem>>, vector<8x128xf32>
    %c0_1 = arith.constant 0 : index
    %c0_2 = arith.constant 0 : index
    %1 = vector.load %arg3[%c0_1, %c0_2] : memref<128x128xf32, #tpu.memory_space<vmem>>, vector<128x128xf32>
    %cst = arith.constant dense<0.000000e+00> : vector<8x128xf32>
    %2 = tpu.matmul %0, %1, %cst {dimension_numbers = #tpu.dot_dimension_numbers<[1], [0], [0], [1], [0, 0, 1, 1], [], []>} : vector<8x128xf32>, vector<128x128xf32>, vector<8x128xf32> -> vector<8x128xf32>
    %c0_3 = arith.constant 0 : index
    %c0_4 = arith.constant 0 : index
    %3 = vector.load %arg4[%c0_3, %c0_4] : memref<1x128xf32, #tpu.memory_space<vmem>>, vector<1x128xf32>
    %4 = vector.broadcast %3 : vector<1x128xf32> to vector<8x128xf32>
    %5 = arith.addf %2, %4 : vector<8x128xf32>
    %c0_5 = arith.constant 0 : index
    %c0_6 = arith.constant 0 : index
    %6 = vector.load %arg2[%c0_5, %c0_6] : memref<8x128xf32, #tpu.memory_space<vmem>>, vector<8x128xf32>
    %c0_7 = arith.constant 0 : index
    %c0_8 = arith.constant 0 : index
    %7 = vector.load %arg5[%c0_7, %c0_8] : memref<128x128xf32, #tpu.memory_space<vmem>>, vector<128x128xf32>
    %cst_9 = arith.constant dense<0.000000e+00> : vector<8x128xf32>
    %8 = tpu.matmul %6, %7, %cst_9 {dimension_numbers = #tpu.dot_dimension_numbers<[1], [0], [0], [1], [0, 0, 1, 1], [], []>} : vector<8x128xf32>, vector<128x128xf32>, vector<8x128xf32> -> vector<8x128xf32>
    %c0_10 = arith.constant 0 : index
    %c0_11 = arith.constant 0 : index
    %9 = vector.load %arg6[%c0_10, %c0_11] : memref<1x128xf32, #tpu.memory_space<vmem>>, vector<1x128xf32>
    %10 = vector.broadcast %9 : vector<1x128xf32> to vector<8x128xf32>
    %11 = arith.addf %8, %10 : vector<8x128xf32>
    %cst_12 = arith.constant 5.000000e-01 : f32
    %12 = vector.broadcast %cst_12 : f32 to vector<8x128xf32>
    %13 = arith.mulf %12, %5 : vector<8x128xf32>
    %14 = math.tanh %13 : vector<8x128xf32>
    %cst_13 = arith.constant 1.000000e+00 : f32
    %15 = vector.broadcast %cst_13 : f32 to vector<8x128xf32>
    %16 = arith.addf %14, %15 : vector<8x128xf32>
    %cst_14 = arith.constant 5.000000e-01 : f32
    %17 = vector.broadcast %cst_14 : f32 to vector<8x128xf32>
    %18 = arith.mulf %17, %16 : vector<8x128xf32>
    %19 = arith.mulf %18, %11 : vector<8x128xf32>
    %c0_15 = arith.constant 0 : index
    %c0_16 = arith.constant 0 : index
    %20 = vector.load %arg7[%c0_15, %c0_16] : memref<128x128xf32, #tpu.memory_space<vmem>>, vector<128x128xf32>
    %cst_17 = arith.constant dense<0.000000e+00> : vector<8x128xf32>
    %21 = tpu.matmul %19, %20, %cst_17 {dimension_numbers = #tpu.dot_dimension_numbers<[1], [0], [0], [1], [0, 0, 1, 1], [], []>} : vector<8x128xf32>, vector<128x128xf32>, vector<8x128xf32> -> vector<8x128xf32>
    %c0_18 = arith.constant 0 : index
    %c0_19 = arith.constant 0 : index
    %22 = vector.load %arg8[%c0_18, %c0_19] : memref<1x128xf32, #tpu.memory_space<vmem>>, vector<1x128xf32>
    %23 = vector.broadcast %22 : vector<1x128xf32> to vector<8x128xf32>
    %24 = arith.addf %21, %23 : vector<8x128xf32>
    %c0_20 = arith.constant 0 : index
    %c0_21 = arith.constant 0 : index
    %25 = vector.load %arg9[%c0_20, %c0_21] : memref<8x128xf32, #tpu.memory_space<vmem>>, vector<8x128xf32>
    tpu.vector_store %arg9[%c0_20, %c0_21], %5 {strides = array<i32>} : memref<8x128xf32, #tpu.memory_space<vmem>>, vector<8x128xf32>,
    %c0_22 = arith.constant 0 : index
    %c0_23 = arith.constant 0 : index
    %26 = vector.load %arg10[%c0_22, %c0_23] : memref<8x128xf32, #tpu.memory_space<vmem>>, vector<8x128xf32>
    tpu.vector_store %arg10[%c0_22, %c0_23], %11 {strides = array<i32>} : memref<8x128xf32, #tpu.memory_space<vmem>>, vector<8x128xf32>,
    %c0_24 = arith.constant 0 : index
    %c0_25 = arith.constant 0 : index
    %27 = vector.load %arg11[%c0_24, %c0_25] : memref<8x128xf32, #tpu.memory_space<vmem>>, vector<8x128xf32>
    tpu.vector_store %arg11[%c0_24, %c0_25], %24 {strides = array<i32>} : memref<8x128xf32, #tpu.memory_space<vmem>>, vector<8x128xf32>,
    return
  }
  func.func @transform_0(%arg0: i32) -> (i32, i32) {
    %c0_i32 = arith.constant 0 : i32
    %c0_i32_0 = arith.constant 0 : i32
    return %arg0, %c0_i32 : i32, i32
  }
  func.func @transform_1(%arg0: i32) -> (i32, i32) {
    %c0_i32 = arith.constant 0 : i32
    %c0_i32_0 = arith.constant 0 : i32
    return %arg0, %c0_i32 : i32, i32
  }
  func.func @transform_2(%arg0: i32) -> (i32, i32) {
    %c0_i32 = arith.constant 0 : i32
    %c0_i32_0 = arith.constant 0 : i32
    %c0_i32_1 = arith.constant 0 : i32
    return %c0_i32, %c0_i32_0 : i32, i32
  }
  func.func @transform_3(%arg0: i32) -> (i32, i32) {
    %c0_i32 = arith.constant 0 : i32
    %c0_i32_0 = arith.constant 0 : i32
    %c0_i32_1 = arith.constant 0 : i32
    return %c0_i32, %c0_i32_0 : i32, i32
  }
  func.func @transform_4(%arg0: i32) -> (i32, i32) {
    %c0_i32 = arith.constant 0 : i32
    %c0_i32_0 = arith.constant 0 : i32
    %c0_i32_1 = arith.constant 0 : i32
    return %c0_i32, %c0_i32_0 : i32, i32
  }
  func.func @transform_5(%arg0: i32) -> (i32, i32) {
    %c0_i32 = arith.constant 0 : i32
    %c0_i32_0 = arith.constant 0 : i32
    %c0_i32_1 = arith.constant 0 : i32
    return %c0_i32, %c0_i32_0 : i32, i32
  }
  func.func @transform_6(%arg0: i32) -> (i32, i32) {
    %c0_i32 = arith.constant 0 : i32
    %c0_i32_0 = arith.constant 0 : i32
    %c0_i32_1 = arith.constant 0 : i32
    return %c0_i32, %c0_i32_0 : i32, i32
  }
  func.func @transform_7(%arg0: i32) -> (i32, i32) {
    %c0_i32 = arith.constant 0 : i32
    %c0_i32_0 = arith.constant 0 : i32
    %c0_i32_1 = arith.constant 0 : i32
    return %c0_i32, %c0_i32_0 : i32, i32
  }
  func.func @transform_8(%arg0: i32) -> (i32, i32) {
    %c0_i32 = arith.constant 0 : i32
    %c0_i32_0 = arith.constant 0 : i32
    return %arg0, %c0_i32 : i32, i32
  }
  func.func @transform_9(%arg0: i32) -> (i32, i32) {
    %c0_i32 = arith.constant 0 : i32
    %c0_i32_0 = arith.constant 0 : i32
    return %arg0, %c0_i32 : i32, i32
  }
  func.func @transform_10(%arg0: i32) -> (i32, i32) {
    %c0_i32 = arith.constant 0 : i32
    %c0_i32_0 = arith.constant 0 : i32
    return %arg0, %c0_i32 : i32, i32
  }
}

</mosaic_0001>

<llo_original>
// kernel: tpu_custom_call.1
$region0: #{tpu_custom_call.1}
  #allocation0 [shape = 'u32[]', space=smem, size = 0x4, offset = 0x4, fixed_abs, tag = 'smem constant byte address 0x4 - core index']
  #allocation1 [shape = 'u32[144,128]{1,0:T(1,128)}', space=vmem, size = 0x12000, scoped, tag = 'internal scratch']
  %s0 = inlined_call_operand.hbm [shape: f32[16,128], index: 0, kind: input, shape index: {}]
  %s1 = inlined_call_operand.hbm [shape: f32[16,128], index: 1, kind: input, shape index: {}]
  %s2 = inlined_call_operand.hbm [shape: f32[128,128], index: 2, kind: input, shape index: {}]
  %s3 = inlined_call_operand.vmem [shape: f32[1,128], index: 3, kind: input, shape index: {}]
  %s4 = inlined_call_operand.hbm [shape: f32[128,128], index: 4, kind: input, shape index: {}]
  %s5 = inlined_call_operand.vmem [shape: f32[1,128], index: 5, kind: input, shape index: {}]
  %s6 = inlined_call_operand.hbm [shape: f32[128,128], index: 6, kind: input, shape index: {}]
  %s7 = inlined_call_operand.vmem [shape: f32[1,128], index: 7, kind: input, shape index: {}]
  %s8 = inlined_call_operand.hbm [shape: f32[16,128], index: 8, kind: output, shape index: {0}]
  %s9 = inlined_call_operand.hbm [shape: f32[16,128], index: 9, kind: output, shape index: {1}]
  %s10 = inlined_call_operand.hbm [shape: f32[16,128], index: 10, kind: output, shape index: {2}]
  %11 = xla_tuple %s8, %s9, %s10
  %s12 = sld [smem:[#allocation0]]
  $region101: #{tpu_custom_call.1} parent=0
    _
  %s14 = ssub.s32 1, %s12
  %s15 = scalar_select 0, %s14, %s12
  $region1: #{tpu_custom_call.1} parent=0
    #allocation2 [shape = 'u8[8192]{0}', space=vmem, size = 0x2000, scoped, tag = 'input window, operand 0']
    #allocation3 [shape = 's32[2]{0}', space=sflag, size = 0x8, scoped, tag = 'scoped memory for tpu_custom_call.1']
    #allocation4 [shape = 's32[2]{0}', space=sflag, size = 0x8, scoped, tag = 'scoped memory for tpu_custom_call.1']
    #allocation5 [shape = 'u8[8192]{0}', space=vmem, size = 0x2000, scoped, tag = 'input window, operand 1']
    #allocation6 [shape = 's32[2]{0}', space=sflag, size = 0x8, scoped, tag = 'scoped memory for tpu_custom_call.1']
    #allocation7 [shape = 'u8[65536]{0}', space=vmem, size = 0x10000, scoped, tag = 'input window, operand 2, single buffered']
    #allocation8 [shape = 'u8[65536]{0}', space=vmem, size = 0x10000, scoped, tag = 'input window, operand 4, single buffered']
    #allocation9 [shape = 's32[1]{0}', space=sflag, size = 0x4, scoped, tag = 'scoped memory for tpu_custom_call.1']
    #allocation10 [shape = 'u8[65536]{0}', space=vmem, size = 0x10000, scoped, tag = 'input window, operand 6, single buffered']
    #allocation11 [shape = 'u8[8192]{0}', space=vmem, size = 0x2000, scoped, tag = 'output window, operand 0']
    #allocation12 [shape = 'u8[8192]{0}', space=vmem, size = 0x2000, scoped, tag = 'output window, operand 1']
    #allocation13 [shape = 's32[2]{0}', space=sflag, size = 0x8, scoped, tag = 'scoped memory for tpu_custom_call.1']
    #allocation14 [shape = 'u8[8192]{0}', space=vmem, size = 0x2000, scoped, tag = 'output window, operand 2']
    %16 = vsyncpa [#allocation3], 0
    %s17 = scalar_lea.sflag [#allocation3], 1
    %18 = vsyncpa %s17, 0
    %19 = vsyncpa [#allocation6], 0
    %s20 = scalar_lea.sflag [#allocation6], 1
    %21 = vsyncpa %s20, 0
    %22 = vsyncpa [#allocation9], 0
    %23 = vsyncpa [#allocation4], 0
    %s24 = scalar_lea.sflag [#allocation4], 1
    %25 = vsyncpa %s24, 0
    %26 = vsyncpa [#allocation13], 0
    %s27 = scalar_lea.sflag [#allocation13], 1
    %28 = vsyncpa %s27, 0
    loop: start=0, step=1, limit=4
    $region2: #{tpu_custom_call.1} parent=1 // loop_pre_header
      _
    $region3: #{tpu_custom_call.1} parent=1 // loop_header
      %s30 = sphi 0, %s34
      %p31 = scmp.ge.s32.totalorder %s30, 4
      %s40 = sphi 0, %s42
      %s43 = sphi 0, %s40
      %s44 = sphi 0, %s43
      %s60 = sphi 0, %s44
      %s66 = sphi 0, %s68
      %s69 = sphi 0, %s66
      %s70 = sphi 0, %s69
      %s86 = sphi 0, %s70
      %s90 = sphi 0, %s90
      %s92 = sphi 0, %s90
      %s93 = sphi 0, %s92
      %s107 = sphi 0, %s93
      %s111 = sphi 0, %s111
      %s113 = sphi 0, %s111
      %s114 = sphi 0, %s113
      %s128 = sphi 0, %s114
      %s132 = sphi 0, %s132
      %s134 = sphi 0, %s132
      %s135 = sphi 0, %s134
      %s149 = sphi 0, %s135
      %s153 = sphi 0, %s153
      %s155 = sphi 0, %s153
      %s156 = sphi 0, %s155
      %s170 = sphi 0, %s156
      %s174 = sphi 0, %s174
      %s176 = sphi 0, %s174
      %s177 = sphi 0, %s176
      %s191 = sphi 0, %s177
      %s195 = sphi 0, %s195
      %s197 = sphi 0, %s195
      %s198 = sphi 0, %s197
      %s212 = sphi 0, %s198
      %s218 = sphi 0, %s220
      %s221 = sphi 0, %s218
      %s222 = sphi 0, %s221
      %s238 = sphi 0, %s222
      %s244 = sphi 0, %s246
      %s247 = sphi 0, %s244
      %s248 = sphi 0, %s247
      %s264 = sphi 0, %s248
      %s270 = sphi 0, %s272
      %s273 = sphi 0, %s270
      %s274 = sphi 0, %s273
      %s290 = sphi 0, %s274
    $region4: #{tpu_custom_call.1} parent=1 // loop_header_branch
      %33 = sbr.rel (%p31) target = $region8
    $region5: #{tpu_custom_call.1} parent=1 // loop_body
      %s35 = ssub.s32 %s30, 1
      %s36 = ssub.s32 %s30, 2
      %s37 = sadd.s32 %s30, 1
      %s38 = ssub.s32 %s30, %s37
      %p39 = scmp.eq.s32.totalorder %s38, 0
      %s41 = sadd.s32 %s40, 1
      %s42 = scalar_select %p39, %s40, %s41
      %p45 = pneg %p39
      %p46 = scmp.eq.s32.totalorder %s30, 1
      %p47 = por %p45, %p46
      %p48 = scmp.ne.s32.totalorder %s40, %s43
      %p49 = scmp.eq.s32.totalorder %s30, 0
      %p50 = por %p48, %p49
      %p51 = scmp.ne.s32.totalorder %s40, %s43
      %p52 = scmp.eq.s32.totalorder %s35, 1
      %p53 = por %p51, %p52
      %p54 = scmp.ne.s32.totalorder %s43, %s44
      %p55 = scmp.eq.s32.totalorder %s35, 0
      %p56 = por %p54, %p55
      %p57 = scmp.ne.s32.totalorder %s43, %s44
      %p58 = scmp.eq.s32.totalorder %s36, 1
      %p59 = por %p57, %p58
      %p61 = scmp.ne.s32.totalorder %s44, %s60
      %p62 = scmp.eq.s32.totalorder %s36, 0
      %p63 = por %p61, %p62
      %s64 = ssub.s32 %s30, %s37
      %p65 = scmp.eq.s32.totalorder %s64, 0
      %s67 = sadd.s32 %s66, 1
      %s68 = scalar_select %p65, %s66, %s67
      %p71 = pneg %p65
      %p72 = scmp.eq.s32.totalorder %s30, 1
      %p73 = por %p71, %p72
      %p74 = scmp.ne.s32.totalorder %s66, %s69
      %p75 = scmp.eq.s32.totalorder %s30, 0
      %p76 = por %p74, %p75
      %p77 = scmp.ne.s32.totalorder %s66, %s69
      %p78 = scmp.eq.s32.totalorder %s35, 1
      %p79 = por %p77, %p78
      %p80 = scmp.ne.s32.totalorder %s69, %s70
      %p81 = scmp.eq.s32.totalorder %s35, 0
      %p82 = por %p80, %p81
      %p83 = scmp.ne.s32.totalorder %s69, %s70
      %p84 = scmp.eq.s32.totalorder %s36, 1
      %p85 = por %p83, %p84
      %p87 = scmp.ne.s32.totalorder %s70, %s86
      %p88 = scmp.eq.s32.totalorder %s36, 0
      %p89 = por %p87, %p88
      %s91 = sadd.s32 %s90, 1
      %p94 = scmp.eq.s32.totalorder %s30, 1
      %p95 = scmp.ne.s32.totalorder %s90, %s92
      %p96 = scmp.eq.s32.totalorder %s30, 0
      %p97 = por %p95, %p96
      %p98 = scmp.ne.s32.totalorder %s90, %s92
      %p99 = scmp.eq.s32.totalorder %s35, 1
      %p100 = por %p98, %p99
      %p101 = scmp.ne.s32.totalorder %s92, %s93
      %p102 = scmp.eq.s32.totalorder %s35, 0
      %p103 = por %p101, %p102
      %p104 = scmp.ne.s32.totalorder %s92, %s93
      %p105 = scmp.eq.s32.totalorder %s36, 1
      %p106 = por %p104, %p105
      %p108 = scmp.ne.s32.totalorder %s93, %s107
      %p109 = scmp.eq.s32.totalorder %s36, 0
      %p110 = por %p108, %p109
      %s112 = sadd.s32 %s111, 1
      %p115 = scmp.eq.s32.totalorder %s30, 1
      %p116 = scmp.ne.s32.totalorder %s111, %s113
      %p117 = scmp.eq.s32.totalorder %s30, 0
      %p118 = por %p116, %p117
      %p119 = scmp.ne.s32.totalorder %s111, %s113
      %p120 = scmp.eq.s32.totalorder %s35, 1
      %p121 = por %p119, %p120
      %p122 = scmp.ne.s32.totalorder %s113, %s114
      %p123 = scmp.eq.s32.totalorder %s35, 0
      %p124 = por %p122, %p123
      %p125 = scmp.ne.s32.totalorder %s113, %s114
      %p126 = scmp.eq.s32.totalorder %s36, 1
      %p127 = por %p125, %p126
      %p129 = scmp.ne.s32.totalorder %s114, %s128
      %p130 = scmp.eq.s32.totalorder %s36, 0
      %p131 = por %p129, %p130
      %s133 = sadd.s32 %s132, 1
      %p136 = scmp.eq.s32.totalorder %s30, 1
      %p137 = scmp.ne.s32.totalorder %s132, %s134
      %p138 = scmp.eq.s32.totalorder %s30, 0
      %p139 = por %p137, %p138
      %p140 = scmp.ne.s32.totalorder %s132, %s134
      %p141 = scmp.eq.s32.totalorder %s35, 1
      %p142 = por %p140, %p141
      %p143 = scmp.ne.s32.totalorder %s134, %s135
      %p144 = scmp.eq.s32.totalorder %s35, 0
      %p145 = por %p143, %p144
      %p146 = scmp.ne.s32.totalorder %s134, %s135
      %p147 = scmp.eq.s32.totalorder %s36, 1
      %p148 = por %p146, %p147
      %p150 = scmp.ne.s32.totalorder %s135, %s149
      %p151 = scmp.eq.s32.totalorder %s36, 0
      %p152 = por %p150, %p151
      %s154 = sadd.s32 %s153, 1
      %p157 = scmp.eq.s32.totalorder %s30, 1
      %p158 = scmp.ne.s32.totalorder %s153, %s155
      %p159 = scmp.eq.s32.totalorder %s30, 0
      %p160 = por %p158, %p159
      %p161 = scmp.ne.s32.totalorder %s153, %s155
      %p162 = scmp.eq.s32.totalorder %s35, 1
      %p163 = por %p161, %p162
      %p164 = scmp.ne.s32.totalorder %s155, %s156
      %p165 = scmp.eq.s32.totalorder %s35, 0
      %p166 = por %p164, %p165
      %p167 = scmp.ne.s32.totalorder %s155, %s156
      %p168 = scmp.eq.s32.totalorder %s36, 1
      %p169 = por %p167, %p168
      %p171 = scmp.ne.s32.totalorder %s156, %s170
      %p172 = scmp.eq.s32.totalorder %s36, 0
      %p173 = por %p171, %p172
      %s175 = sadd.s32 %s174, 1
      %p178 = scmp.eq.s32.totalorder %s30, 1
      %p179 = scmp.ne.s32.totalorder %s174, %s176
      %p180 = scmp.eq.s32.totalorder %s30, 0
      %p181 = por %p179, %p180
      %p182 = scmp.ne.s32.totalorder %s174, %s176
      %p183 = scmp.eq.s32.totalorder %s35, 1
      %p184 = por %p182, %p183
      %p185 = scmp.ne.s32.totalorder %s176, %s177
      %p186 = scmp.eq.s32.totalorder %s35, 0
      %p187 = por %p185, %p186
      %p188 = scmp.ne.s32.totalorder %s176, %s177
      %p189 = scmp.eq.s32.totalorder %s36, 1
      %p190 = por %p188, %p189
      %p192 = scmp.ne.s32.totalorder %s177, %s191
      %p193 = scmp.eq.s32.totalorder %s36, 0
      %p194 = por %p192, %p193
      %s196 = sadd.s32 %s195, 1
      %p199 = scmp.eq.s32.totalorder %s30, 1
      %p200 = scmp.ne.s32.totalorder %s195, %s197
      %p201 = scmp.eq.s32.totalorder %s30, 0
      %p202 = por %p200, %p201
      %p203 = scmp.ne.s32.totalorder %s195, %s197
      %p204 = scmp.eq.s32.totalorder %s35, 1
      %p205 = por %p203, %p204
      %p206 = scmp.ne.s32.totalorder %s197, %s198
      %p207 = scmp.eq.s32.totalorder %s35, 0
      %p208 = por %p206, %p207
      %p209 = scmp.ne.s32.totalorder %s197, %s198
      %p210 = scmp.eq.s32.totalorder %s36, 1
      %p211 = por %p209, %p210
      %p213 = scmp.ne.s32.totalorder %s198, %s212
      %p214 = scmp.eq.s32.totalorder %s36, 0
      %p215 = por %p213, %p214
      %s216 = ssub.s32 %s30, %s37
      %p217 = scmp.eq.s32.totalorder %s216, 0
      %s219 = sadd.s32 %s218, 1
      %s220 = scalar_select %p217, %s218, %s219
      %p223 = pneg %p217
      %p224 = scmp.eq.s32.totalorder %s30, 1
      %p225 = por %p223, %p224
      %p226 = scmp.ne.s32.totalorder %s218, %s221
      %p227 = scmp.eq.s32.totalorder %s30, 0
      %p228 = por %p226, %p227
      %p229 = scmp.ne.s32.totalorder %s218, %s221
      %p230 = scmp.eq.s32.totalorder %s35, 1
      %p231 = por %p229, %p230
      %p232 = scmp.ne.s32.totalorder %s221, %s222
      %p233 = scmp.eq.s32.totalorder %s35, 0
      %p234 = por %p232, %p233
      %p235 = scmp.ne.s32.totalorder %s221, %s222
      %p236 = scmp.eq.s32.totalorder %s36, 1
      %p237 = por %p235, %p236
      %p239 = scmp.ne.s32.totalorder %s222, %s238
      %p240 = scmp.eq.s32.totalorder %s36, 0
      %p241 = por %p239, %p240
      %s242 = ssub.s32 %s30, %s37
      %p243 = scmp.eq.s32.totalorder %s242, 0
      %s245 = sadd.s32 %s244, 1
      %s246 = scalar_select %p243, %s244, %s245
      %p249 = pneg %p243
      %p250 = scmp.eq.s32.totalorder %s30, 1
      %p251 = por %p249, %p250
      %p252 = scmp.ne.s32.totalorder %s244, %s247
      %p253 = scmp.eq.s32.totalorder %s30, 0
      %p254 = por %p252, %p253
      %p255 = scmp.ne.s32.totalorder %s244, %s247
      %p256 = scmp.eq.s32.totalorder %s35, 1
      %p257 = por %p255, %p256
      %p258 = scmp.ne.s32.totalorder %s247, %s248
      %p259 = scmp.eq.s32.totalorder %s35, 0
      %p260 = por %p258, %p259
      %p261 = scmp.ne.s32.totalorder %s247, %s248
      %p262 = scmp.eq.s32.totalorder %s36, 1
      %p263 = por %p261, %p262
      %p265 = scmp.ne.s32.totalorder %s248, %s264
      %p266 = scmp.eq.s32.totalorder %s36, 0
      %p267 = por %p265, %p266
      %s268 = ssub.s32 %s30, %s37
      %p269 = scmp.eq.s32.totalorder %s268, 0
      %s271 = sadd.s32 %s270, 1
      %s272 = scalar_select %p269, %s270, %s271
      %p275 = pneg %p269
      %p276 = scmp.eq.s32.totalorder %s30, 1
      %p277 = por %p275, %p276
      %p278 = scmp.ne.s32.totalorder %s270, %s273
      %p279 = scmp.eq.s32.totalorder %s30, 0
      %p280 = por %p278, %p279
      %p281 = scmp.ne.s32.totalorder %s270, %s273
      %p282 = scmp.eq.s32.totalorder %s35, 1
      %p283 = por %p281, %p282
      %p284 = scmp.ne.s32.totalorder %s273, %s274
      %p285 = scmp.eq.s32.totalorder %s35, 0
      %p286 = por %p284, %p285
      %p287 = scmp.ne.s32.totalorder %s273, %s274
      %p288 = scmp.eq.s32.totalorder %s36, 1
      %p289 = por %p287, %p288
      %p291 = scmp.ne.s32.totalorder %s274, %s290
      %p292 = scmp.eq.s32.totalorder %s36, 0
      %p293 = por %p291, %p292
      %p294 = scmp.le.s32.totalorder 1, %s30
      %p295 = scmp.lt.s32.totalorder %s30, 3
      %p296 = pnand %p294, %p295
      %p297 = pneg %p296
      // Predicated region
      $region9: #{tpu_custom_call.1} parent=5 // pred_check
        _
      $region10: #{tpu_custom_call.1} parent=5 // pred_check_branch
        %299 = sbr.rel (%p296) target = $region12
      $region11: #{tpu_custom_call.1} parent=5 // pred_region
        %s300 = ssub.s32 %s30, 1
        // Predicated region
        $region13: #{tpu_custom_call.1} parent=11 // pred_check
          %p301 = pneg %p103
        $region14: #{tpu_custom_call.1} parent=11 // pred_check_branch
          %303 = sbr.rel (%p301) target = $region16
        $region15: #{tpu_custom_call.1} parent=11 // pred_region
          %s305 = ssub.s32 2048, 2048
          %306 = vsyncadd [#allocation6], %s305
          %s307 = sshll.u32 [#allocation7], 4
          %s308 = int_to_ptr.vmem [resolvable:$true] %s307
          %313 = dma.hbm_to_vmem [thread:$0]  %s2, 2048, %s308, [#allocation6], 128, 128, 8
        $region16: #{tpu_custom_call.1} parent=11 // pred_fallthru
          _
        // Predicated region
        $region17: #{tpu_custom_call.1} parent=11 // pred_check
          %p314 = pneg %p124
        $region18: #{tpu_custom_call.1} parent=11 // pred_check_branch
          %316 = sbr.rel (%p314) target = $region20
        $region19: #{tpu_custom_call.1} parent=11 // pred_region
          _
        $region20: #{tpu_custom_call.1} parent=11 // pred_fallthru
          _
        // Predicated region
        $region21: #{tpu_custom_call.1} parent=11 // pred_check
          %p317 = pneg %p145
        $region22: #{tpu_custom_call.1} parent=11 // pred_check_branch
          %319 = sbr.rel (%p317) target = $region24
        $region23: #{tpu_custom_call.1} parent=11 // pred_region
          %s321 = ssub.s32 2048, 2048
          %322 = vsyncadd [#allocation9], %s321
          %s323 = sshll.u32 [#allocation8], 4
          %s324 = int_to_ptr.vmem [resolvable:$true] %s323
          %329 = dma.hbm_to_vmem [thread:$0]  %s4, 2048, %s324, [#allocation9], 128, 128, 8
        $region24: #{tpu_custom_call.1} parent=11 // pred_fallthru
          _
        // Predicated region
        $region25: #{tpu_custom_call.1} parent=11 // pred_check
          %p330 = pneg %p166
        $region26: #{tpu_custom_call.1} parent=11 // pred_check_branch
          %332 = sbr.rel (%p330) target = $region28
        $region27: #{tpu_custom_call.1} parent=11 // pred_region
          _
        $region28: #{tpu_custom_call.1} parent=11 // pred_fallthru
          _
        // Predicated region
        $region29: #{tpu_custom_call.1} parent=11 // pred_check
          %p333 = pneg %p187
        $region30: #{tpu_custom_call.1} parent=11 // pred_check_branch
          %335 = sbr.rel (%p333) target = $region32
        $region31: #{tpu_custom_call.1} parent=11 // pred_region
          %s337 = ssub.s32 2048, 2048
          %338 = vsyncadd [#allocation9], %s337
          %s339 = sshll.u32 [#allocation10], 4
          %s340 = int_to_ptr.vmem [resolvable:$true] %s339
          %345 = dma.hbm_to_vmem [thread:$0]  %s6, 2048, %s340, [#allocation9], 128, 128, 8
        $region32: #{tpu_custom_call.1} parent=11 // pred_fallthru
          _
        // Predicated region
        $region33: #{tpu_custom_call.1} parent=11 // pred_check
          %p346 = pneg %p208
        $region34: #{tpu_custom_call.1} parent=11 // pred_check_branch
          %348 = sbr.rel (%p346) target = $region36
        $region35: #{tpu_custom_call.1} parent=11 // pred_region
          _
        $region36: #{tpu_custom_call.1} parent=11 // pred_fallthru
          _
      $region12: #{tpu_custom_call.1} parent=5 // pred_fallthru
        _
      %p349 = scmp.lt.s32.totalorder %s30, 2
      // Predicated region
      $region37: #{tpu_custom_call.1} parent=5 // pred_check
        %p350 = pneg %p349
      $region38: #{tpu_custom_call.1} parent=5 // pred_check_branch
        %352 = sbr.rel (%p350) target = $region40
      $region39: #{tpu_custom_call.1} parent=5 // pred_region
        // Predicated region
        $region41: #{tpu_custom_call.1} parent=39 // pred_check
          %p353 = pneg %p50
        $region42: #{tpu_custom_call.1} parent=39 // pred_check_branch
          %355 = sbr.rel (%p353) target = $region44
        $region43: #{tpu_custom_call.1} parent=39 // pred_region
          %s356 = sand.u32 %s40, 1
          %s357 = scalar_lea.sflag [#allocation3], %s356
          %s358 = sand.u32 %s40, 1
          %s359 = smul.addr %s358, 8
          %s360 = scalar_lea.vmem [#allocation2], %s359
          %s362 = ssub.s32 128, 128
          %363 = vsyncadd %s357, %s362
          %s364 = smul.addr %s30, 128
          %s365 = scalar_lea.hbm %s0, %s364
          %s367 = sshll.u32 %s360, 4
          %s368 = int_to_ptr.vmem [resolvable:$true] %s367
          %370 = dma.hbm_to_vmem [thread:$0]  %s365, 128, %s368, %s357
        $region44: #{tpu_custom_call.1} parent=39 // pred_fallthru
          _
        // Predicated region
        $region45: #{tpu_custom_call.1} parent=39 // pred_check
          %p371 = pneg %p76
        $region46: #{tpu_custom_call.1} parent=39 // pred_check_branch
          %373 = sbr.rel (%p371) target = $region48
        $region47: #{tpu_custom_call.1} parent=39 // pred_region
          %s374 = sand.u32 %s30, 1
          %s375 = scalar_lea.sflag [#allocation6], %s374
          %s376 = sand.u32 %s66, 1
          %s377 = smul.addr %s376, 8
          %s378 = scalar_lea.vmem [#allocation5], %s377
          %s380 = ssub.s32 128, 128
          %381 = vsyncadd %s375, %s380
          %s382 = smul.addr %s30, 128
          %s383 = scalar_lea.hbm %s1, %s382
          %s385 = sshll.u32 %s378, 4
          %s386 = int_to_ptr.vmem [resolvable:$true] %s385
          %388 = dma.hbm_to_vmem [thread:$0]  %s383, 128, %s386, %s375
        $region48: #{tpu_custom_call.1} parent=39 // pred_fallthru
          _
      $region40: #{tpu_custom_call.1} parent=5 // pred_fallthru
        _
      %p389 = scmp.le.s32.totalorder 1, %s30
      %p390 = scmp.lt.s32.totalorder %s30, 3
      %p391 = pnand %p389, %p390
      %p392 = pneg %p391
      // Predicated region
      $region49: #{tpu_custom_call.1} parent=5 // pred_check
        _
      $region50: #{tpu_custom_call.1} parent=5 // pred_check_branch
        %394 = sbr.rel (%p391) target = $region52
      $region51: #{tpu_custom_call.1} parent=5 // pred_region
        %s395 = ssub.s32 %s30, 1
        %s396 = sand.u32 %s43, 1
        %s397 = scalar_lea.sflag [#allocation3], %s396
        %s398 = sand.u32 %s43, 1
        %s399 = smul.addr %s398, 8
        %s400 = scalar_lea.vmem [#allocation2], %s399
        // Predicated region
        $region53: #{tpu_custom_call.1} parent=51 // pred_check
          %p401 = pneg %p56
        $region54: #{tpu_custom_call.1} parent=51 // pred_check_branch
          %403 = sbr.rel (%p401) target = $region56
        $region55: #{tpu_custom_call.1} parent=51 // pred_region
          %404 = dma.done %s397, 128
        $region56: #{tpu_custom_call.1} parent=51 // pred_fallthru
          _
        %s405 = sand.u32 %s35, 1
        %s406 = scalar_lea.sflag [#allocation6], %s405
        %s407 = sand.u32 %s69, 1
        %s408 = smul.addr %s407, 8
        %s409 = scalar_lea.vmem [#allocation5], %s408
        // Predicated region
        $region57: #{tpu_custom_call.1} parent=51 // pred_check
          %p410 = pneg %p82
        $region58: #{tpu_custom_call.1} parent=51 // pred_check_branch
          %412 = sbr.rel (%p410) target = $region60
        $region59: #{tpu_custom_call.1} parent=51 // pred_region
          %413 = dma.done %s406, 128
        $region60: #{tpu_custom_call.1} parent=51 // pred_fallthru
          _
        // Predicated region
        $region61: #{tpu_custom_call.1} parent=51 // pred_check
          %p414 = pneg %p103
        $region62: #{tpu_custom_call.1} parent=51 // pred_check_branch
          %416 = sbr.rel (%p414) target = $region64
        $region63: #{tpu_custom_call.1} parent=51 // pred_region
          %417 = dma.done [#allocation6], 2048
        $region64: #{tpu_custom_call.1} parent=51 // pred_fallthru
          _
        // Predicated region
        $region65: #{tpu_custom_call.1} parent=51 // pred_check
          %p418 = pneg %p145
        $region66: #{tpu_custom_call.1} parent=51 // pred_check_branch
          %420 = sbr.rel (%p418) target = $region68
        $region67: #{tpu_custom_call.1} parent=51 // pred_region
          %421 = dma.done [#allocation9], 2048
        $region68: #{tpu_custom_call.1} parent=51 // pred_fallthru
          _
        // Predicated region
        $region69: #{tpu_custom_call.1} parent=51 // pred_check
          %p422 = pneg %p187
        $region70: #{tpu_custom_call.1} parent=51 // pred_check_branch
          %424 = sbr.rel (%p422) target = $region72
        $region71: #{tpu_custom_call.1} parent=51 // pred_region
          %425 = dma.done [#allocation9], 2048
        $region72: #{tpu_custom_call.1} parent=51 // pred_fallthru
          _
        %s426 = sand.u32 %s43, 1
        %s427 = scalar_lea.sflag [#allocation3], %s426
        %s428 = sand.u32 %s43, 1
        %s429 = smul.addr %s428, 8
        %s430 = scalar_lea.vmem [#allocation2], %s429
        %p431 = pneg %p56
        %p432 = pneg %p53
        %s433 = sand.u32 %s35, 1
        %s434 = scalar_lea.sflag [#allocation6], %s433
        %s435 = sand.u32 %s69, 1
        %s436 = smul.addr %s435, 8
        %s437 = scalar_lea.vmem [#allocation5], %s436
        %p438 = pneg %p82
        %p439 = pneg %p79
        %p440 = pneg %p103
        %p441 = pneg %p100
        %p442 = pneg %p124
        %p443 = pneg %p121
        %p444 = pneg %p145
        %p445 = pneg %p142
        %p446 = pneg %p166
        %p447 = pneg %p163
        %p448 = pneg %p187
        %p449 = pneg %p184
        %p450 = pneg %p208
        %p451 = pneg %p205
        %p452 = pneg %p234
        %p453 = pneg %p231
        %s454 = sand.u32 %s221, 1
        %s455 = scalar_lea.sflag [#allocation4], %s454
        %s456 = sand.u32 %s221, 1
        %s457 = smul.addr %s456, 8
        %s458 = scalar_lea.vmem [#allocation11], %s457
        %p459 = pneg %p260
        %p460 = pneg %p257
        %s461 = sand.u32 %s35, 1
        %s462 = scalar_lea.sflag [#allocation13], %s461
        %s463 = sand.u32 %s247, 1
        %s464 = smul.addr %s463, 8
        %s465 = scalar_lea.vmem [#allocation12], %s464
        %p466 = pneg %p286
        %p467 = pneg %p283
        %s468 = sand.u32 %s35, 1
        %s469 = scalar_lea.sflag [#allocation13], %s468
        %s470 = sand.u32 %s273, 1
        %s471 = smul.addr %s470, 8
        %s472 = scalar_lea.vmem [#allocation14], %s471
        %v473 = vld [vmem:[%s400] sm:$0xff]
        %v474 = vld [vmem:[#allocation7] sm:$0xff]
        %v475 = vld [vmem:[#allocation7 + $0x8] sm:$0xff]
        %v476 = vld [vmem:[#allocation7 + $0x10] sm:$0xff]
        %v477 = vld [vmem:[#allocation7 + $0x18] sm:$0xff]
        %v478 = vld [vmem:[#allocation7 + $0x20] sm:$0xff]
        %v479 = vld [vmem:[#allocation7 + $0x28] sm:$0xff]
        %v480 = vld [vmem:[#allocation7 + $0x30] sm:$0xff]
        %v481 = vld [vmem:[#allocation7 + $0x38] sm:$0xff]
        %v482 = vld [vmem:[#allocation7 + $0x40] sm:$0xff]
        %v483 = vld [vmem:[#allocation7 + $0x48] sm:$0xff]
        %v484 = vld [vmem:[#allocation7 + $0x50] sm:$0xff]
        %v485 = vld [vmem:[#allocation7 + $0x58] sm:$0xff]
        %v486 = vld [vmem:[#allocation7 + $0x60] sm:$0xff]
        %v487 = vld [vmem:[#allocation7 + $0x68] sm:$0xff]
        %v488 = vld [vmem:[#allocation7 + $0x70] sm:$0xff]
        %v489 = vld [vmem:[#allocation7 + $0x78] sm:$0xff]
        %v490 = vld [vmem:[%s3] sm:$0x1]
        %v492 = vlaneseq
        %v493 = vshrl.u32 %v492, 7
        %v494 = vsub.s32 0, %v493
        %v495 = vrot.slane %v490, %v494
        %497 = vmatprep.subr.mxu0 0.0
        %498 = vmatpush1.msra.mxu0 %v474
        %499 = vmatprep.subr.mxu0 0.0
        %500 = vmatpush1.msra.mxu0 %v475
        %501 = vmatprep.subr.mxu0 0.0
        %502 = vmatpush1.msra.mxu0 %v476
        %503 = vmatprep.subr.mxu0 0.0
        %504 = vmatpush1.msra.mxu0 %v477
        %505 = vmatprep.subr.mxu0 0.0
        %506 = vmatpush1.msra.mxu0 %v478
        %507 = vmatprep.subr.mxu0 0.0
        %508 = vmatpush1.msra.mxu0 %v479
        %509 = vmatprep.subr.mxu0 0.0
        %510 = vmatpush1.msra.mxu0 %v480
        %511 = vmatprep.subr.mxu0 0.0
        %512 = vmatpush1.msra.mxu0 %v481
        %513 = vmatprep.subr.mxu0 0.0
        %514 = vmatpush1.msra.mxu0 %v482
        %515 = vmatprep.subr.mxu0 0.0
        %516 = vmatpush1.msra.mxu0 %v483
        %517 = vmatprep.subr.mxu0 0.0
        %518 = vmatpush1.msra.mxu0 %v484
        %519 = vmatprep.subr.mxu0 0.0
        %520 = vmatpush1.msra.mxu0 %v485
        %521 = vmatprep.subr.mxu0 0.0
        %522 = vmatpush1.msra.mxu0 %v486
        %523 = vmatprep.subr.mxu0 0.0
        %524 = vmatpush1.msra.mxu0 %v487
        %525 = vmatprep.subr.mxu0 0.0
        %526 = vmatpush1.msra.mxu0 %v488
        %527 = vmatprep.subr.mxu0 0.0
        %528 = vmatpush1.msra.mxu0 %v489
        %529 = vmatprep.subr.mxu0 0.0
        %530 = vmatpush1.msra.mxu0 0.0
        %531 = vmatprep.subr.mxu0 0.0
        %532 = vmatpush1.msra.mxu0 0.0
        %533 = vmatprep.subr.mxu0 0.0
        %534 = vmatpush1.msra.mxu0 0.0
        %535 = vmatprep.subr.mxu0 0.0
        %536 = vmatpush1.msra.mxu0 0.0
        %537 = vmatprep.subr.mxu0 0.0
        %538 = vmatpush1.msra.mxu0 0.0
        %539 = vmatprep.subr.mxu0 0.0
        %540 = vmatpush1.msra.mxu0 0.0
        %541 = vmatprep.subr.mxu0 0.0
        %542 = vmatpush1.msra.mxu0 0.0
        %543 = vmatprep.subr.mxu0 0.0
        %544 = vmatpush1.msra.mxu0 0.0
        %545 = vmatprep.subr.mxu0 0.0
        %546 = vmatpush1.msra.mxu0 0.0
        %547 = vmatprep.subr.mxu0 0.0
        %548 = vmatpush1.msra.mxu0 0.0
        %549 = vmatprep.subr.mxu0 0.0
        %550 = vmatpush1.msra.mxu0 0.0
        %551 = vmatprep.subr.mxu0 0.0
        %552 = vmatpush1.msra.mxu0 0.0
        %553 = vmatprep.subr.mxu0 0.0
        %554 = vmatpush1.msra.mxu0 0.0
        %555 = vmatprep.subr.mxu0 0.0
        %556 = vmatpush1.msra.mxu0 0.0
        %557 = vmatprep.subr.mxu0 0.0
        %558 = vmatpush1.msra.mxu0 0.0
        %559 = vmatprep.subr.mxu0 0.0
        %560 = vmatpush1.msra.mxu0 0.0
        %561 = vmatprep.mubr.f32.mxu0 0.0
        %562 = vmatmul.mubr.f32.gmra.mrb[0].mxu0 %v473
        %v563 = vpop.f32.mrb[0].mxu0
        %v564 = vadd.f32 %v495, %v563
        %v565 = vpop.f32.mrb[0].mxu0
        %566 = vdwg.mxu0
        %v567 = vld [vmem:[%s409] sm:$0xff]
        %v568 = vld [vmem:[#allocation8] sm:$0xff]
        %v569 = vld [vmem:[#allocation8 + $0x8] sm:$0xff]
        %v570 = vld [vmem:[#allocation8 + $0x10] sm:$0xff]
        %v571 = vld [vmem:[#allocation8 + $0x18] sm:$0xff]
        %v572 = vld [vmem:[#allocation8 + $0x20] sm:$0xff]
        %v573 = vld [vmem:[#allocation8 + $0x28] sm:$0xff]
        %v574 = vld [vmem:[#allocation8 + $0x30] sm:$0xff]
        %v575 = vld [vmem:[#allocation8 + $0x38] sm:$0xff]
        %v576 = vld [vmem:[#allocation8 + $0x40] sm:$0xff]
        %v577 = vld [vmem:[#allocation8 + $0x48] sm:$0xff]
        %v578 = vld [vmem:[#allocation8 + $0x50] sm:$0xff]
        %v579 = vld [vmem:[#allocation8 + $0x58] sm:$0xff]
        %v580 = vld [vmem:[#allocation8 + $0x60] sm:$0xff]
        %v581 = vld [vmem:[#allocation8 + $0x68] sm:$0xff]
        %v582 = vld [vmem:[#allocation8 + $0x70] sm:$0xff]
        %v583 = vld [vmem:[#allocation8 + $0x78] sm:$0xff]
        %v584 = vld [vmem:[%s5] sm:$0x1]
        %v586 = vlaneseq
        %v587 = vshrl.u32 %v586, 7
        %v588 = vsub.s32 0, %v587
        %v589 = vrot.slane %v584, %v588
        %591 = vmatprep.subr.mxu0 0.0
        %592 = vmatpush1.msra.mxu0 %v568
        %593 = vmatprep.subr.mxu0 0.0
        %594 = vmatpush1.msra.mxu0 %v569
        %595 = vmatprep.subr.mxu0 0.0
        %596 = vmatpush1.msra.mxu0 %v570
        %597 = vmatprep.subr.mxu0 0.0
        %598 = vmatpush1.msra.mxu0 %v571
        %599 = vmatprep.subr.mxu0 0.0
        %600 = vmatpush1.msra.mxu0 %v572
        %601 = vmatprep.subr.mxu0 0.0
        %602 = vmatpush1.msra.mxu0 %v573
        %603 = vmatprep.subr.mxu0 0.0
        %604 = vmatpush1.msra.mxu0 %v574
        %605 = vmatprep.subr.mxu0 0.0
        %606 = vmatpush1.msra.mxu0 %v575
        %607 = vmatprep.subr.mxu0 0.0
        %608 = vmatpush1.msra.mxu0 %v576
        %609 = vmatprep.subr.mxu0 0.0
        %610 = vmatpush1.msra.mxu0 %v577
        %611 = vmatprep.subr.mxu0 0.0
        %612 = vmatpush1.msra.mxu0 %v578
        %613 = vmatprep.subr.mxu0 0.0
        %614 = vmatpush1.msra.mxu0 %v579
        %615 = vmatprep.subr.mxu0 0.0
        %616 = vmatpush1.msra.mxu0 %v580
        %617 = vmatprep.subr.mxu0 0.0
        %618 = vmatpush1.msra.mxu0 %v581
        %619 = vmatprep.subr.mxu0 0.0
        %620 = vmatpush1.msra.mxu0 %v582
        %621 = vmatprep.subr.mxu0 0.0
        %622 = vmatpush1.msra.mxu0 %v583
        %623 = vmatprep.subr.mxu0 0.0
        %624 = vmatpush1.msra.mxu0 0.0
        %625 = vmatprep.subr.mxu0 0.0
        %626 = vmatpush1.msra.mxu0 0.0
        %627 = vmatprep.subr.mxu0 0.0
        %628 = vmatpush1.msra.mxu0 0.0
        %629 = vmatprep.subr.mxu0 0.0
        %630 = vmatpush1.msra.mxu0 0.0
        %631 = vmatprep.subr.mxu0 0.0
        %632 = vmatpush1.msra.mxu0 0.0
        %633 = vmatprep.subr.mxu0 0.0
        %634 = vmatpush1.msra.mxu0 0.0
        %635 = vmatprep.subr.mxu0 0.0
        %636 = vmatpush1.msra.mxu0 0.0
        %637 = vmatprep.subr.mxu0 0.0
        %638 = vmatpush1.msra.mxu0 0.0
        %639 = vmatprep.subr.mxu0 0.0
        %640 = vmatpush1.msra.mxu0 0.0
        %641 = vmatprep.subr.mxu0 0.0
        %642 = vmatpush1.msra.mxu0 0.0
        %643 = vmatprep.subr.mxu0 0.0
        %644 = vmatpush1.msra.mxu0 0.0
        %645 = vmatprep.subr.mxu0 0.0
        %646 = vmatpush1.msra.mxu0 0.0
        %647 = vmatprep.subr.mxu0 0.0
        %648 = vmatpush1.msra.mxu0 0.0
        %649 = vmatprep.subr.mxu0 0.0
        %650 = vmatpush1.msra.mxu0 0.0
        %651 = vmatprep.subr.mxu0 0.0
        %652 = vmatpush1.msra.mxu0 0.0
        %653 = vmatprep.subr.mxu0 0.0
        %654 = vmatpush1.msra.mxu0 0.0
        %655 = vmatprep.mubr.f32.mxu0 0.0
        %656 = vmatmul.mubr.f32.gmra.mrb[0].mxu0 %v567
        %v657 = vpop.f32.mrb[0].mxu0
        %v658 = vadd.f32 %v589, %v657
        %v659 = vpop.f32.mrb[0].mxu0
        %660 = vdwg.mxu0
        %v661 = vmul.f32 %v564, 0.5
        %v662 = vtanh.pop %v661
        %v663 = vadd.f32 %v662, 1.0
        %v664 = vmul.f32 %v663, 0.5
        %v665 = vmul.f32 %v664, %v658
        %v666 = vld [vmem:[#allocation10] sm:$0xff]
        %v667 = vld [vmem:[#allocation10 + $0x8] sm:$0xff]
        %v668 = vld [vmem:[#allocation10 + $0x10] sm:$0xff]
        %v669 = vld [vmem:[#allocation10 + $0x18] sm:$0xff]
        %v670 = vld [vmem:[#allocation10 + $0x20] sm:$0xff]
        %v671 = vld [vmem:[#allocation10 + $0x28] sm:$0xff]
        %v672 = vld [vmem:[#allocation10 + $0x30] sm:$0xff]
        %v673 = vld [vmem:[#allocation10 + $0x38] sm:$0xff]
        %v674 = vld [vmem:[#allocation10 + $0x40] sm:$0xff]
        %v675 = vld [vmem:[#allocation10 + $0x48] sm:$0xff]
        %v676 = vld [vmem:[#allocation10 + $0x50] sm:$0xff]
        %v677 = vld [vmem:[#allocation10 + $0x58] sm:$0xff]
        %v678 = vld [vmem:[#allocation10 + $0x60] sm:$0xff]
        %v679 = vld [vmem:[#allocation10 + $0x68] sm:$0xff]
        %v680 = vld [vmem:[#allocation10 + $0x70] sm:$0xff]
        %v681 = vld [vmem:[#allocation10 + $0x78] sm:$0xff]
        %v682 = vld [vmem:[%s7] sm:$0x1]
        %v684 = vlaneseq
        %v685 = vshrl.u32 %v684, 7
        %v686 = vsub.s32 0, %v685
        %v687 = vrot.slane %v682, %v686
        %689 = vmatprep.subr.mxu0 0.0
        %690 = vmatpush1.msra.mxu0 %v666
        %691 = vmatprep.subr.mxu0 0.0
        %692 = vmatpush1.msra.mxu0 %v667
        %693 = vmatprep.subr.mxu0 0.0
        %694 = vmatpush1.msra.mxu0 %v668
        %695 = vmatprep.subr.mxu0 0.0
        %696 = vmatpush1.msra.mxu0 %v669
        %697 = vmatprep.subr.mxu0 0.0
        %698 = vmatpush1.msra.mxu0 %v670
        %699 = vmatprep.subr.mxu0 0.0
        %700 = vmatpush1.msra.mxu0 %v671
        %701 = vmatprep.subr.mxu0 0.0
        %702 = vmatpush1.msra.mxu0 %v672
        %703 = vmatprep.subr.mxu0 0.0
        %704 = vmatpush1.msra.mxu0 %v673
        %705 = vmatprep.subr.mxu0 0.0
        %706 = vmatpush1.msra.mxu0 %v674
        %707 = vmatprep.subr.mxu0 0.0
        %708 = vmatpush1.msra.mxu0 %v675
        %709 = vmatprep.subr.mxu0 0.0
        %710 = vmatpush1.msra.mxu0 %v676
        %711 = vmatprep.subr.mxu0 0.0
        %712 = vmatpush1.msra.mxu0 %v677
        %713 = vmatprep.subr.mxu0 0.0
        %714 = vmatpush1.msra.mxu0 %v678
        %715 = vmatprep.subr.mxu0 0.0
        %716 = vmatpush1.msra.mxu0 %v679
        %717 = vmatprep.subr.mxu0 0.0
        %718 = vmatpush1.msra.mxu0 %v680
        %719 = vmatprep.subr.mxu0 0.0
        %720 = vmatpush1.msra.mxu0 %v681
        %721 = vmatprep.subr.mxu0 0.0
        %722 = vmatpush1.msra.mxu0 0.0
        %723 = vmatprep.subr.mxu0 0.0
        %724 = vmatpush1.msra.mxu0 0.0
        %725 = vmatprep.subr.mxu0 0.0
        %726 = vmatpush1.msra.mxu0 0.0
        %727 = vmatprep.subr.mxu0 0.0
        %728 = vmatpush1.msra.mxu0 0.0
        %729 = vmatprep.subr.mxu0 0.0
        %730 = vmatpush1.msra.mxu0 0.0
        %731 = vmatprep.subr.mxu0 0.0
        %732 = vmatpush1.msra.mxu0 0.0
        %733 = vmatprep.subr.mxu0 0.0
        %734 = vmatpush1.msra.mxu0 0.0
        %735 = vmatprep.subr.mxu0 0.0
        %736 = vmatpush1.msra.mxu0 0.0
        %737 = vmatprep.subr.mxu0 0.0
        %738 = vmatpush1.msra.mxu0 0.0
        %739 = vmatprep.subr.mxu0 0.0
        %740 = vmatpush1.msra.mxu0 0.0
        %741 = vmatprep.subr.mxu0 0.0
        %742 = vmatpush1.msra.mxu0 0.0
        %743 = vmatprep.subr.mxu0 0.0
        %744 = vmatpush1.msra.mxu0 0.0
        %745 = vmatprep.subr.mxu0 0.0
        %746 = vmatpush1.msra.mxu0 0.0
        %747 = vmatprep.subr.mxu0 0.0
        %748 = vmatpush1.msra.mxu0 0.0
        %749 = vmatprep.subr.mxu0 0.0
        %750 = vmatpush1.msra.mxu0 0.0
        %751 = vmatprep.subr.mxu0 0.0
        %752 = vmatpush1.msra.mxu0 0.0
        %753 = vmatprep.mubr.f32.mxu0 0.0
        %754 = vmatmul.mubr.f32.gmra.mrb[0].mxu0 %v665
        %v755 = vpop.f32.mrb[0].mxu0
        %v756 = vadd.f32 %v687, %v755
        %v757 = vpop.f32.mrb[0].mxu0
        %758 = vdwg.mxu0
        %759 = vst [vmem:[%s458] sm:$0xff] %v564
        %760 = vst [vmem:[%s465] sm:$0xff] %v658
        %761 = vst [vmem:[%s472] sm:$0xff] %v756
        %s762 = sand.u32 %s221, 1
        %s763 = scalar_lea.sflag [#allocation4], %s762
        %s764 = sand.u32 %s221, 1
        %s765 = smul.addr %s764, 8
        %s766 = scalar_lea.vmem [#allocation11], %s765
        %s767 = sand.u32 %s35, 1
        %s768 = scalar_lea.sflag [#allocation13], %s767
        %s769 = sand.u32 %s247, 1
        %s770 = smul.addr %s769, 8
        %s771 = scalar_lea.vmem [#allocation12], %s770
        %s772 = sand.u32 %s35, 1
        %s773 = scalar_lea.sflag [#allocation13], %s772
        %s774 = sand.u32 %s273, 1
        %s775 = smul.addr %s774, 8
        %s776 = scalar_lea.vmem [#allocation14], %s775
        // Predicated region
        $region73: #{tpu_custom_call.1} parent=51 // pred_check
          %p777 = pneg %p231
        $region74: #{tpu_custom_call.1} parent=51 // pred_check_branch
          %779 = sbr.rel (%p777) target = $region76
        $region75: #{tpu_custom_call.1} parent=51 // pred_region
          %s781 = ssub.s32 128, 128
          %782 = vsyncadd %s763, %s781
          %s783 = smul.addr %s35, 128
          %s784 = scalar_lea.hbm %s8, %s783
          %s786 = sshll.u32 %s766, 4
          %s787 = int_to_ptr.vmem [resolvable:$true] %s786
          %789 = dma.vmem_to_hbm [thread:$0]  %s787, 128, %s784, %s763
        $region76: #{tpu_custom_call.1} parent=51 // pred_fallthru
          _
        // Predicated region
        $region77: #{tpu_custom_call.1} parent=51 // pred_check
          %p790 = pneg %p257
        $region78: #{tpu_custom_call.1} parent=51 // pred_check_branch
          %792 = sbr.rel (%p790) target = $region80
        $region79: #{tpu_custom_call.1} parent=51 // pred_region
          %s794 = ssub.s32 128, 128
          %795 = vsyncadd %s768, %s794
          %s796 = smul.addr %s35, 128
          %s797 = scalar_lea.hbm %s9, %s796
          %s799 = sshll.u32 %s771, 4
          %s800 = int_to_ptr.vmem [resolvable:$true] %s799
          %802 = dma.vmem_to_hbm [thread:$0]  %s800, 128, %s797, %s768
        $region80: #{tpu_custom_call.1} parent=51 // pred_fallthru
          _
        // Predicated region
        $region81: #{tpu_custom_call.1} parent=51 // pred_check
          %p803 = pneg %p283
        $region82: #{tpu_custom_call.1} parent=51 // pred_check_branch
          %805 = sbr.rel (%p803) target = $region84
        $region83: #{tpu_custom_call.1} parent=51 // pred_region
          %s807 = ssub.s32 128, 128
          %808 = vsyncadd %s773, %s807
          %s809 = smul.addr %s35, 128
          %s810 = scalar_lea.hbm %s10, %s809
          %s812 = sshll.u32 %s776, 4
          %s813 = int_to_ptr.vmem [resolvable:$true] %s812
          %815 = dma.vmem_to_hbm [thread:$0]  %s813, 128, %s810, %s773
        $region84: #{tpu_custom_call.1} parent=51 // pred_fallthru
          _
      $region52: #{tpu_custom_call.1} parent=5 // pred_fallthru
        _
      %p816 = scmp.le.s32.totalorder 2, %s30
      // Predicated region
      $region85: #{tpu_custom_call.1} parent=5 // pred_check
        %p817 = pneg %p816
      $region86: #{tpu_custom_call.1} parent=5 // pred_check_branch
        %819 = sbr.rel (%p817) target = $region88
      $region87: #{tpu_custom_call.1} parent=5 // pred_region
        %s820 = ssub.s32 %s30, 2
        // Predicated region
        $region89: #{tpu_custom_call.1} parent=87 // pred_check
          %p821 = pneg %p237
        $region90: #{tpu_custom_call.1} parent=87 // pred_check_branch
          %823 = sbr.rel (%p821) target = $region92
        $region91: #{tpu_custom_call.1} parent=87 // pred_region
          %s824 = sand.u32 %s222, 1
          %s825 = scalar_lea.sflag [#allocation4], %s824
          %s826 = sand.u32 %s222, 1
          %s827 = smul.addr %s826, 8
          %s828 = scalar_lea.vmem [#allocation11], %s827
          %829 = dma.done %s825, 128
        $region92: #{tpu_custom_call.1} parent=87 // pred_fallthru
          _
        // Predicated region
        $region93: #{tpu_custom_call.1} parent=87 // pred_check
          %p830 = pneg %p263
        $region94: #{tpu_custom_call.1} parent=87 // pred_check_branch
          %832 = sbr.rel (%p830) target = $region96
        $region95: #{tpu_custom_call.1} parent=87 // pred_region
          %s833 = sand.u32 %s36, 1
          %s834 = scalar_lea.sflag [#allocation13], %s833
          %s835 = sand.u32 %s248, 1
          %s836 = smul.addr %s835, 8
          %s837 = scalar_lea.vmem [#allocation12], %s836
          %838 = dma.done %s834, 128
        $region96: #{tpu_custom_call.1} parent=87 // pred_fallthru
          _
        // Predicated region
        $region97: #{tpu_custom_call.1} parent=87 // pred_check
          %p839 = pneg %p289
        $region98: #{tpu_custom_call.1} parent=87 // pred_check_branch
          %841 = sbr.rel (%p839) target = $region100
        $region99: #{tpu_custom_call.1} parent=87 // pred_region
          %s842 = sand.u32 %s36, 1
          %s843 = scalar_lea.sflag [#allocation13], %s842
          %s844 = sand.u32 %s274, 1
          %s845 = smul.addr %s844, 8
          %s846 = scalar_lea.vmem [#allocation14], %s845
          %847 = dma.done %s843, 128
        $region100: #{tpu_custom_call.1} parent=87 // pred_fallthru
          _
      $region88: #{tpu_custom_call.1} parent=5 // pred_fallthru
        _
    $region6: #{tpu_custom_call.1} parent=1 // loop_footer
      %s34 = sadd.s32 1, %s30
    $region7: #{tpu_custom_call.1} parent=1 // loop_footer_branch
      %29 = sbr.rel target = $region3
    $region8: #{tpu_custom_call.1} parent=1 // loop_exit
      _
    %848 = vsyncpa [#allocation3], 1
    %s849 = scalar_lea.sflag [#allocation3], 1
    %850 = vsyncpa %s849, 1
    %851 = vsyncpa [#allocation6], 1
    %s852 = scalar_lea.sflag [#allocation6], 1
    %853 = vsyncpa %s852, 1
    %854 = vsyncpa [#allocation9], 1
    %855 = vsyncpa [#allocation4], 1
    %s856 = scalar_lea.sflag [#allocation4], 1
    %857 = vsyncpa %s856, 1
    %858 = vsyncpa [#allocation13], 1
    %s859 = scalar_lea.sflag [#allocation13], 1
    %860 = vsyncpa %s859, 1

</llo_original>
